<compile_context>
chip_gen: v7x
topology: tpu7x:2x2x1
jax: 0.10.0
libtpu: 0.0.40
codegen_flags: <defaults>
</compile_context>

<pallas_src>
import math

import jax
import jax.numpy as jnp
from jax.experimental import pallas as pl
from jax.experimental.pallas import tpu as pltpu


def attention_kernel(x_ref, w_ref, b_ref, o_ref):
    # x_ref: (TB, S, F) batch tile
    # w_ref: (1, F) lane-dense weight row
    # b_ref: (1, S) bias row
    # o_ref: (TB, F) output tile
    x = x_ref[...].astype(jnp.float32)          # (TB, S, F)
    w = w_ref[...].astype(jnp.float32)          # (1, F)
    b = b_ref[...].astype(jnp.float32)          # (1, S)

    # scores: VPU broadcast-mul + lane (XLU) reduce -> (TB, S)
    e = jnp.sum(x * w, axis=-1) + b             # (TB, S)
    a = jnp.exp(jnp.tanh(e))                    # (TB, S), EUP ops

    # per-row denominator (correct under batching)
    denom = jnp.sum(a, axis=1, keepdims=True) + 1e-10   # (TB, 1)

    # deferred normalization: unnormalized weighted sum over steps, then scale
    ws = jnp.sum(x * a[..., None], axis=1)      # (TB, F)
    out = ws / denom                            # exact to hold 1e-5 tolerance

    o_ref[...] = out.astype(o_ref.dtype)


def attention_forward(x, weight, bias, *, x_block_bytes=4 * 1024 * 1024):
    """x: (B, S, F), weight: (F, 1), bias: (S,) -> (B, F)"""
    B, S, F = x.shape
    w_row = weight.reshape(1, F)                # lane-dense weight
    b_row = bias.reshape(1, S)

    # Choose TB so one x tile is <= x_block_bytes (double-buffered -> ~2x that),
    # conservative enough for v5e's 16 MiB scoped-VMEM default and v7x's 64 MiB
    # physical VMEM. TB is a multiple of 8 when tiling (sublane alignment), or
    # the whole batch when it already fits.
    itemsize = jnp.dtype(x.dtype).itemsize
    rows_cap = max(1, x_block_bytes // (S * F * itemsize))
    if B <= rows_cap:
        tb = B
        x_in = x
    else:
        tb = max(8, (rows_cap // 8) * 8)
        pad = (-B) % tb
        x_in = jnp.pad(x, ((0, pad), (0, 0), (0, 0))) if pad else x
    bp = x_in.shape[0]
    grid = (bp // tb,)

    out = pl.pallas_call(
        attention_kernel,
        out_shape=jax.ShapeDtypeStruct((bp, F), x.dtype),
        grid_spec=pltpu.PrefetchScalarGridSpec(
            num_scalar_prefetch=0,
            grid=grid,
            in_specs=[
                pl.BlockSpec((tb, S, F), lambda i: (i, 0, 0)),
                pl.BlockSpec((1, F), lambda i: (0, 0)),
                pl.BlockSpec((1, S), lambda i: (0, 0)),
            ],
            out_specs=pl.BlockSpec((tb, F), lambda i: (i, 0)),
        ),
        compiler_params=pltpu.CompilerParams(
            dimension_semantics=("parallel",),
        ),
    )(x_in, w_row, b_row)

    return out[:B] if bp != B else out


def attention_reference(x, weight, bias):
    B, S, F = x.shape
    eij = (x.reshape(-1, F) @ weight).reshape(B, S) + bias
    a = jnp.exp(jnp.tanh(eij))
    a = a / (jnp.sum(a, axis=1, keepdims=True) + 1e-10)
    return jnp.sum(x * a[..., None], axis=1)


if __name__ == "__main__":
    # Small shapes consistent with the module: batch=2, step_dim=8, feature_dim=32
    B, S, F = 2, 8, 32

    key = jax.random.PRNGKey(0)
    kx, kw, kb = jax.random.split(key, 3)

    x = jax.random.normal(kx, (B, S, F), dtype=jnp.float32)

    # kaiming_uniform_-style init for weight of shape (F, 1): fan_in=1 -> sqrt(6)
    bound = math.sqrt(6.0)
    weight = jax.random.uniform(kw, (F, 1), minval=-bound, maxval=bound,
                                dtype=jnp.float32)
    # bias parameter (module inits to zeros; use small random values to
    # exercise the bias-add path)
    bias = 0.1 * jax.random.normal(kb, (S,), dtype=jnp.float32)

    out = attention_forward(x, weight, bias)
    jax.block_until_ready(out)

    ref = attention_reference(x, weight, bias)
    assert out.shape == (B, F)
    assert jnp.allclose(out, ref, atol=1e-5, rtol=1e-5), "mismatch vs reference"

    print("KERNEL_OK")
</pallas_src>

<mosaic_0001>
module attributes {stable_mosaic.version = 11 : i64} {
  func.func @attention_kernel(%arg0: i32, %arg1: memref<2x8x32xf32, #tpu.memory_space<vmem>>, %arg2: memref<1x32xf32, #tpu.memory_space<vmem>>, %arg3: memref<1x8xf32, #tpu.memory_space<vmem>>, %arg4: memref<2x32xf32, #tpu.memory_space<vmem>>) attributes {dimension_semantics = [#tpu.dimension_semantics<parallel>], iteration_bounds = array<i64: 1>, scalar_prefetch = 0 : i64, scratch_operands = 0 : i64, tpu.core_type = #tpu.core_type<tc>, window_params = [{transform_indices = @transform_0, window_bounds = array<i64: 2, 8, 32>}, {pipeline_mode = #tpu.pipeline_mode<synchronous>, transform_indices = @transform_1, window_bounds = array<i64: 1, 32>}, {pipeline_mode = #tpu.pipeline_mode<synchronous>, transform_indices = @transform_2, window_bounds = array<i64: 1, 8>}, {transform_indices = @transform_3, window_bounds = array<i64: 2, 32>}]} {
    %c0 = arith.constant 0 : index
    %c0_0 = arith.constant 0 : index
    %c0_1 = arith.constant 0 : index
    %0 = vector.load %arg1[%c0, %c0_0, %c0_1] : memref<2x8x32xf32, #tpu.memory_space<vmem>>, vector<2x8x32xf32>
    %c0_2 = arith.constant 0 : index
    %c0_3 = arith.constant 0 : index
    %1 = vector.load %arg2[%c0_2, %c0_3] : memref<1x32xf32, #tpu.memory_space<vmem>>, vector<1x32xf32>
    %c0_4 = arith.constant 0 : index
    %c0_5 = arith.constant 0 : index
    %2 = vector.load %arg3[%c0_4, %c0_5] : memref<1x8xf32, #tpu.memory_space<vmem>>, vector<1x8xf32>
    %3 = vector.shape_cast %1 : vector<1x32xf32> to vector<1x1x32xf32>
    %4 = vector.broadcast %3 : vector<1x1x32xf32> to vector<2x8x32xf32>
    %5 = arith.mulf %0, %4 : vector<2x8x32xf32>
    %cst = arith.constant dense<0.000000e+00> : vector<2x8xf32>
    %6 = vector.multi_reduction <add>, %5, %cst [2] : vector<2x8x32xf32> to vector<2x8xf32>
    %7 = vector.broadcast %2 : vector<1x8xf32> to vector<2x8xf32>
    %8 = arith.addf %6, %7 : vector<2x8xf32>
    %9 = math.tanh %8 : vector<2x8xf32>
    %10 = math.exp %9 : vector<2x8xf32>
    %cst_6 = arith.constant dense<0.000000e+00> : vector<2xf32>
    %11 = vector.multi_reduction <add>, %10, %cst_6 [1] : vector<2x8xf32> to vector<2xf32>
    %12 = vector.shape_cast %11 : vector<2xf32> to vector<2x1xf32>
    %cst_7 = arith.constant 1.000000e-10 : f32
    %13 = vector.broadcast %cst_7 : f32 to vector<2x1xf32>
    %14 = arith.addf %12, %13 : vector<2x1xf32>
    %15 = vector.shape_cast %10 : vector<2x8xf32> to vector<2x8x1xf32>
    %16 = vector.broadcast %15 : vector<2x8x1xf32> to vector<2x8x32xf32>
    %17 = arith.mulf %0, %16 : vector<2x8x32xf32>
    %cst_8 = arith.constant dense<0.000000e+00> : vector<2x32xf32>
    %18 = vector.multi_reduction <add>, %17, %cst_8 [1] : vector<2x8x32xf32> to vector<2x32xf32>
    %19 = vector.broadcast %14 : vector<2x1xf32> to vector<2x32xf32>
    %20 = arith.divf %18, %19 : vector<2x32xf32>
    %c0_9 = arith.constant 0 : index
    %c0_10 = arith.constant 0 : index
    %21 = vector.load %arg4[%c0_9, %c0_10] : memref<2x32xf32, #tpu.memory_space<vmem>>, vector<2x32xf32>
    tpu.vector_store %arg4[%c0_9, %c0_10], %20 {strides = array<i32>} : memref<2x32xf32, #tpu.memory_space<vmem>>, vector<2x32xf32>,
    return
  }
  func.func @transform_0(%arg0: i32) -> (i32, i32, i32) {
    %c0_i32 = arith.constant 0 : i32
    %c0_i32_0 = arith.constant 0 : i32
    %c0_i32_1 = arith.constant 0 : i32
    return %arg0, %c0_i32, %c0_i32_0 : i32, i32, i32
  }
  func.func @transform_1(%arg0: i32) -> (i32, i32) {
    %c0_i32 = arith.constant 0 : i32
    %c0_i32_0 = arith.constant 0 : i32
    %c0_i32_1 = arith.constant 0 : i32
    return %c0_i32, %c0_i32_0 : i32, i32
  }
  func.func @transform_2(%arg0: i32) -> (i32, i32) {
    %c0_i32 = arith.constant 0 : i32
    %c0_i32_0 = arith.constant 0 : i32
    %c0_i32_1 = arith.constant 0 : i32
    return %c0_i32, %c0_i32_0 : i32, i32
  }
  func.func @transform_3(%arg0: i32) -> (i32, i32) {
    %c0_i32 = arith.constant 0 : i32
    %c0_i32_0 = arith.constant 0 : i32
    return %arg0, %c0_i32 : i32, i32
  }
}

</mosaic_0001>

<llo_original>
// kernel: tpu_custom_call.1
$region0: #{tpu_custom_call.1}
  #allocation0 [shape = 'u32[]', space=smem, size = 0x4, offset = 0x4, fixed_abs, tag = 'smem constant byte address 0x4 - core index']
  #allocation1 [shape = 'u32[144,128]{1,0:T(1,128)}', space=vmem, size = 0x12000, scoped, tag = 'internal scratch']
  %s0 = inlined_call_operand.hbm [shape: f32[2,8,32], index: 0, kind: input, shape index: {}]
  %s1 = inlined_call_operand.vmem [shape: f32[1,32], index: 1, kind: input, shape index: {}]
  %s2 = inlined_call_operand.vmem [shape: f32[1,8], index: 2, kind: input, shape index: {}]
  %s3 = inlined_call_operand.hbm [shape: f32[2,32], index: 3, kind: output, shape index: {}]
  %s4 = sld [smem:[#allocation0]]
  $region26: #{tpu_custom_call.1} parent=0
    _
  %s6 = ssub.s32 1, %s4
  %s7 = scalar_select 0, %s6, %s4
  $region1: #{tpu_custom_call.1} parent=0
    #allocation2 [shape = 'u8[8192]{0}', space=vmem, size = 0x2000, scoped, tag = 'input window, operand 0, single buffered']
    #allocation3 [shape = 's32[1]{0}', space=sflag, size = 0x4, scoped, tag = 'scoped memory for tpu_custom_call.1']
    #allocation4 [shape = 's32[1]{0}', space=sflag, size = 0x4, scoped, tag = 'scoped memory for tpu_custom_call.1']
    #allocation5 [shape = 'u8[1024]{0}', space=vmem, size = 0x400, scoped, tag = 'output window, operand 0, single buffered']
    %8 = vsyncpa [#allocation3], 0
    %9 = vsyncpa [#allocation4], 0
    // Predicated region
    $region2: #{tpu_custom_call.1} parent=1 // pred_check
      _
    $region3: #{tpu_custom_call.1} parent=1 // pred_check_branch
      %11 = sbr.rel (0) target = $region5
    $region4: #{tpu_custom_call.1} parent=1 // pred_region
      %s13 = ssub.s32 256, 256
      %14 = vsyncadd [#allocation3], %s13
      %s15 = sshll.u32 [#allocation2], 4
      %s16 = int_to_ptr.vmem [resolvable:$true] %s15
      %21 = dma.hbm_to_vmem [thread:$0]  %s0, 256, %s16, [#allocation3], 128, 128, 8
    $region5: #{tpu_custom_call.1} parent=1 // pred_fallthru
      _
    // Predicated region
    $region6: #{tpu_custom_call.1} parent=1 // pred_check
      _
    $region7: #{tpu_custom_call.1} parent=1 // pred_check_branch
      %23 = sbr.rel (0) target = $region9
    $region8: #{tpu_custom_call.1} parent=1 // pred_region
      _
    $region9: #{tpu_custom_call.1} parent=1 // pred_fallthru
      _
    // Predicated region
    $region10: #{tpu_custom_call.1} parent=1 // pred_check
      _
    $region11: #{tpu_custom_call.1} parent=1 // pred_check_branch
      %25 = sbr.rel (0) target = $region13
    $region12: #{tpu_custom_call.1} parent=1 // pred_region
      _
    $region13: #{tpu_custom_call.1} parent=1 // pred_fallthru
      _
    // Predicated region
    $region14: #{tpu_custom_call.1} parent=1 // pred_check
      _
    $region15: #{tpu_custom_call.1} parent=1 // pred_check_branch
      %27 = sbr.rel (0) target = $region17
    $region16: #{tpu_custom_call.1} parent=1 // pred_region
      %28 = dma.done [#allocation3], 256
    $region17: #{tpu_custom_call.1} parent=1 // pred_fallthru
      _
    %v29 = vld [vmem:[#allocation2] sm:$0xff]
    %v30 = vld [vmem:[#allocation2 + $0x8] sm:$0xff]
    %v31 = vld [vmem:[%s1] sm:$0x1]
    %v32 = vld [vmem:[%s2] sm:$0x1]
    %v34 = vlaneseq
    %v35 = vshrl.u32 %v34, 7
    %v36 = vsub.s32 0, %v35
    %v37 = vrot.slane %v31, %v36
    %v39 = vmul.f32 %v29, %v37
    %v40 = vmul.f32 %v30, %v37
    %vm41 = vcmask 261120
    %v42 = vsel %vm41, %v39, 0.0
    %43 = vadd.xlane.f32.xlu0 %v42
    %v44 = vpop.xlane.xlu0 %43
    %v45 = vsel %vm41, %v40, 0.0
    %46 = vadd.xlane.f32.xlu0 %v45
    %v47 = vpop.xlane.xlu0 %46
    %v49 = vlaneseq
    %v50 = vshrl.u32 %v49, 7
    %v51 = vsub.s32 0, %v50
    %v52 = vrot.slane %v32, %v51
    %54 = vbcast.lane.b32.xlu0 %v52, 256
    %v55 = vpop.permute.xlu0 %54
    %v57 = vadd.f32 %v44, %v55
    %v58 = vadd.f32 %v47, %v55
    %v59 = vtanh.pop %v57
    %v60 = vtanh.pop %v58
    %v61 = vmul.f32 %v59, 1.442695
    %v62 = vpow.pop %v61
    %v63 = vmul.f32 %v60, 1.442695
    %v64 = vpow.pop %v63
    %67 = vset.pattern.permute.xlu0 0
    %68 = vperm.xlu0 %67, %v62
    %v69 = vpop.permute.xlu0 %68
    %70 = vset.pattern.permute.xlu0 0
    %71 = vperm.xlu0 %70, %v64
    %v72 = vpop.permute.xlu0 %71
    %v73 = vlaneseq
    %v74 = vand.u32 %v73, 127
    %v75 = vlaneseq
    %v76 = vshrl.u32 %v75, 7
    %v77 = vsub.s32 %v74, %v76
    %v78 = vrot.slane %v69, %v77
    %v79 = vlaneseq
    %v80 = vshrl.u32 %v79, 7
    %v81 = vsub.s32 %v74, %v80
    %v82 = vrot.slane %v72, %v81
    %vm83 = vcmask 1041409
    %v84 = vsel %vm83, %v82, %v78
    %vm86 = vcmask 58368
    %v87 = vsel %vm86, %v84, 0.0
    %88 = vadd.xlane.f32.xlu0 %v87
    %v89 = vpop.xlane.xlu0 %88
    %v90 = vadd.f32 %v89, 1e-10
    %v93 = vmul.f32 %v29, %v69
    %v94 = vmul.f32 %v30, %v72
    %v95 = vsel %vm41, %v93, 0.0
    %v96 = vrot.slane %v95, 4
    %v97 = vadd.f32 %v95, %v96
    %v98 = vrot.slane %v97, 2
    %v99 = vadd.f32 %v97, %v98
    %v100 = vrot.slane %v99, 1
    %v101 = vadd.f32 %v99, %v100
    %v102 = vsel %vm41, %v94, 0.0
    %v103 = vrot.slane %v102, 4
    %v104 = vadd.f32 %v102, %v103
    %v105 = vrot.slane %v104, 2
    %v106 = vadd.f32 %v104, %v105
    %v107 = vrot.slane %v106, 1
    %v108 = vadd.f32 %v106, %v107
    %v110 = vrot.slane %v90, 1
    %v113 = vrcp.pop %v90
    %v114 = vmul.f32 %v101, %v113
    %v115 = vrcp.pop %v110
    %v116 = vmul.f32 %v108, %v115
    %v119 = vrot.slane %v116, 7
    %v120 = vsel %vm83, %v119, %v114
    %vm122 = vcmask 254976
    %123 = vst.msk [vmem:[#allocation5] sm:$0x3] %vm122, %v120
    // Predicated region
    $region18: #{tpu_custom_call.1} parent=1 // pred_check
      _
    $region19: #{tpu_custom_call.1} parent=1 // pred_check_branch
      %125 = sbr.rel (0) target = $region21
    $region20: #{tpu_custom_call.1} parent=1 // pred_region
      %s127 = ssub.s32 32, 32
      %128 = vsyncadd [#allocation4], %s127
      %s130 = sshll.u32 [#allocation5], 4
      %s131 = int_to_ptr.vmem [resolvable:$true] %s130
      %133 = dma.vmem_to_hbm [thread:$0]  %s131, 32, %s3, [#allocation4]
    $region21: #{tpu_custom_call.1} parent=1 // pred_fallthru
      _
    // Predicated region
    $region22: #{tpu_custom_call.1} parent=1 // pred_check
      _
    $region23: #{tpu_custom_call.1} parent=1 // pred_check_branch
      %135 = sbr.rel (0) target = $region25
    $region24: #{tpu_custom_call.1} parent=1 // pred_region
      %136 = dma.done [#allocation4], 32
    $region25: #{tpu_custom_call.1} parent=1 // pred_fallthru
      _
    %137 = vsyncpa [#allocation3], 1
    %138 = vsyncpa [#allocation4], 1

</llo_original>
